<compile_context>
chip_gen: v7x
topology: tpu7x:2x2x1
jax: 0.10.0
libtpu: 0.0.40
codegen_flags: <defaults>
</compile_context>

<pallas_src>
import functools

import numpy as np
import jax
import jax.numpy as jnp
from jax import lax
from jax.experimental import pallas as pl
from jax.experimental.pallas import tpu as pltpu

_LANES = 128
_MAX_BLOCK_ROWS = 8192                 # 8192x128 f32 = 4 MiB per operand per step
_VMEM_LIMIT_BYTES = 32 * 1024 * 1024   # 2 operands x 2 buffers x 4 MiB = 16 MiB (+ headroom)


def _sublane_multiple(*dtypes):
    """Minimum sublane multiple for the input dtypes (8 f32 / 16 bf16 / 32 int8)."""
    m = 8
    for dt in dtypes:
        item = np.dtype(dt).itemsize
        if item == 2:
            m = max(m, 16)
        elif item == 1:
            m = max(m, 32)
    return m


def _round_up(x, m):
    return ((x + m - 1) // m) * m


def _mse_partial_kernel(x_ref, t_ref, out_ref, *, block_rows, rows, needs_mask):
    """One grid step: (block_rows, 128) squared-diff partial sums -> (8, 128)."""
    d = x_ref[...].astype(jnp.float32) - t_ref[...].astype(jnp.float32)
    dd = d * d

    def _store(v):
        # (block_rows, 128) -> (block_rows//8, 8, 128) matches the native
        # (8, 128) vreg tiling, so the reshape is free and the reduce is pure
        # VPU adds.  (8, 128) output block => full-tile, unmasked vst.
        out_ref[...] = jnp.sum(v.reshape(block_rows // 8, 8, _LANES), axis=0)

    if needs_mask:
        # Only the last (ragged) block reads rows past the array edge; mask it
        # by ROW index only (no lane iota, no flat-index int32 overflow risk).
        i = pl.program_id(0)
        last = pl.num_programs(0) - 1

        @pl.when(i == last)
        def _():
            row = lax.broadcasted_iota(jnp.int32, dd.shape, 0)
            _store(jnp.where(i * block_rows + row < rows, dd, 0.0))

        @pl.when(i != last)
        def _():
            _store(dd)
    else:
        _store(dd)


def _content_loss_impl(x, target):
    """loss = mean((x - target)**2) over all elements (PyTorch mse_loss)."""
    assert x.shape == target.shape, "x and target must have the same shape"
    numel = int(x.size)
    xf = x.reshape(-1)
    tf = target.reshape(-1)

    sub = _sublane_multiple(x.dtype, target.dtype)
    rows = numel // _LANES
    tail = numel - rows * _LANES

    if rows < sub:
        # Degenerate/tiny input (< ~1 KiB): plain JAX, a kernel can't help.
        d = xf.astype(jnp.float32) - tf.astype(jnp.float32)
        return jnp.sum(d * d) / jnp.float32(numel)

    # Lane-dense main slab. When numel % 128 == 0 this is a pure bitcast
    # reshape (no copy). Otherwise only the prefix feeds the kernel and the
    # <128-element tail is summed in plain JAX below.
    # TODO(synk): for ragged numel XLA may materialize the prefix slice; a
    # manual-DMA (pl.ANY) variant could avoid that, not worth it for <128 elems.
    if tail:
        xm = xf[: rows * _LANES]
        tm = tf[: rows * _LANES]
    else:
        xm = xf
        tm = tf
    x2d = xm.reshape(rows, _LANES)
    t2d = tm.reshape(rows, _LANES)

    # Block size: as big as comfortably fits VMEM, but keep >=~4 grid steps for
    # mid-size inputs so the pipeline (and both v7x TensorCores) stay busy.
    block_rows = min(_MAX_BLOCK_ROWS, _round_up(pl.cdiv(rows, 4), sub))
    n_blocks = pl.cdiv(rows, block_rows)
    needs_mask = (n_blocks * block_rows) != rows

    kernel = functools.partial(
        _mse_partial_kernel,
        block_rows=block_rows,
        rows=rows,
        needs_mask=needs_mask,
    )

    in_bytes = rows * _LANES * (np.dtype(x.dtype).itemsize + np.dtype(target.dtype).itemsize)
    partials = pl.pallas_call(
        kernel,
        out_shape=jax.ShapeDtypeStruct((n_blocks * 8, _LANES), jnp.float32),
        grid_spec=pltpu.PrefetchScalarGridSpec(
            num_scalar_prefetch=0,
            grid=(n_blocks,),
            in_specs=[
                pl.BlockSpec((block_rows, _LANES), lambda i: (i, 0)),
                pl.BlockSpec((block_rows, _LANES), lambda i: (i, 0)),
            ],
            out_specs=pl.BlockSpec((8, _LANES), lambda i: (i, 0)),
        ),
        compiler_params=pltpu.CompilerParams(
            # Blocks are independent -> parallel axis (lets v7x use both TCs).
            dimension_semantics=("parallel",),
            vmem_limit_bytes=_VMEM_LIMIT_BYTES,
        ),
        cost_estimate=pl.CostEstimate(
            flops=3 * rows * _LANES,
            transcendentals=0,
            bytes_accessed=in_bytes,
        ),
    )(x2d, t2d)

    total = jnp.sum(partials)
    if tail:
        dt = xf[rows * _LANES:].astype(jnp.float32) - tf[rows * _LANES:].astype(jnp.float32)
        total = total + jnp.sum(dt * dt)
    return total / jnp.float32(numel)


# jit so reshapes stay bitcasts and the tiny final reduction fuses; all Python
# branching above depends only on static shapes/dtypes.
content_loss = jax.jit(_content_loss_impl)


class ContentLossPallas:
    """Mirrors the PyTorch ContentLoss module: stores target, forward stores
    the scalar MSE loss and returns x unchanged (identity pass-through, no
    kernel copy needed)."""

    def __init__(self, target):
        self.target = jax.lax.stop_gradient(target)
        self.loss = jnp.float32(0.0)

    def __call__(self, x):
        self.loss = content_loss(x, self.target)
        return x


if __name__ == "__main__":
    key = jax.random.PRNGKey(0)
    kx, kt = jax.random.split(key)
    # NCHW, small shapes: batch=2, channels=4, spatial=16x16
    x = jax.random.normal(kx, (2, 4, 16, 16), dtype=jnp.float32)
    target = jax.random.normal(kt, (2, 4, 16, 16), dtype=jnp.float32)

    module = ContentLossPallas(target)
    y = module(x)
    y = jax.block_until_ready(y)
    loss = jax.block_until_ready(module.loss)

    # Reference check in plain JAX (same semantics as nn.functional.mse_loss)
    ref_loss = jnp.mean((x - target) ** 2)
    assert jnp.allclose(loss, ref_loss, rtol=1e-6, atol=1e-6), (loss, ref_loss)
    assert y is x or jnp.array_equal(y, x)

    print("KERNEL_OK")
</pallas_src>

<mosaic_0001>
module attributes {stable_mosaic.version = 11 : i64} {
  func.func @_mse_partial_kernel(%arg0: i32, %arg1: memref<8x128xf32, #tpu.memory_space<vmem>>, %arg2: memref<8x128xf32, #tpu.memory_space<vmem>>, %arg3: memref<8x128xf32, #tpu.memory_space<vmem>>) attributes {dimension_semantics = [#tpu.dimension_semantics<parallel>], iteration_bounds = array<i64: 2>, scalar_prefetch = 0 : i64, scratch_operands = 0 : i64, tpu.core_type = #tpu.core_type<tc>, window_params = [{transform_indices = @transform_0, window_bounds = array<i64: 8, 128>}, {transform_indices = @transform_1, window_bounds = array<i64: 8, 128>}, {transform_indices = @transform_2, window_bounds = array<i64: 8, 128>}]} {
    %c0 = arith.constant 0 : index
    %c0_0 = arith.constant 0 : index
    %0 = vector.load %arg1[%c0, %c0_0] : memref<8x128xf32, #tpu.memory_space<vmem>>, vector<8x128xf32>
    %c0_1 = arith.constant 0 : index
    %c0_2 = arith.constant 0 : index
    %1 = vector.load %arg2[%c0_1, %c0_2] : memref<8x128xf32, #tpu.memory_space<vmem>>, vector<8x128xf32>
    %2 = arith.subf %0, %1 : vector<8x128xf32>
    %3 = arith.mulf %2, %2 : vector<8x128xf32>
    %4 = vector.shape_cast %3 : vector<8x128xf32> to vector<1x8x128xf32>
    %cst = arith.constant dense<0.000000e+00> : vector<8x128xf32>
    %5 = vector.multi_reduction <add>, %4, %cst [0] : vector<1x8x128xf32> to vector<8x128xf32>
    %c0_3 = arith.constant 0 : index
    %c0_4 = arith.constant 0 : index
    %6 = vector.load %arg3[%c0_3, %c0_4] : memref<8x128xf32, #tpu.memory_space<vmem>>, vector<8x128xf32>
    tpu.vector_store %arg3[%c0_3, %c0_4], %5 {strides = array<i32>} : memref<8x128xf32, #tpu.memory_space<vmem>>, vector<8x128xf32>,
    return
  }
  func.func @transform_0(%arg0: i32) -> (i32, i32) {
    %c0_i32 = arith.constant 0 : i32
    %c0_i32_0 = arith.constant 0 : i32
    return %arg0, %c0_i32 : i32, i32
  }
  func.func @transform_1(%arg0: i32) -> (i32, i32) {
    %c0_i32 = arith.constant 0 : i32
    %c0_i32_0 = arith.constant 0 : i32
    return %arg0, %c0_i32 : i32, i32
  }
  func.func @transform_2(%arg0: i32) -> (i32, i32) {
    %c0_i32 = arith.constant 0 : i32
    %c0_i32_0 = arith.constant 0 : i32
    return %arg0, %c0_i32 : i32, i32
  }
}

</mosaic_0001>

<llo_original>
// kernel: _content_loss_impl.1
$region0: #{_content_loss_impl.1}
  #allocation0 [shape = 'u32[]', space=smem, size = 0x4, offset = 0x4, fixed_abs, tag = 'smem constant byte address 0x4 - core index']
  #allocation1 [shape = 'u32[144,128]{1,0:T(1,128)}', space=vmem, size = 0x12000, scoped, tag = 'internal scratch']
  %s0 = inlined_call_operand.vmem [shape: f32[16,128], index: 0, kind: input, shape index: {}]
  %s1 = inlined_call_operand.vmem [shape: f32[16,128], index: 1, kind: input, shape index: {}]
  %s2 = inlined_call_operand.vmem [shape: f32[16,128], index: 2, kind: output, shape index: {}]
  %s3 = sld [smem:[#allocation0]]
  $region41: #{_content_loss_impl.1} parent=0
    _
  %s5 = ssub.s32 1, %s3
  %s6 = scalar_select 0, %s5, %s3
  loop: start=0, step=1, limit=4
  $region2: #{_content_loss_impl.1} parent=0 // loop_pre_header
    _
  $region3: #{_content_loss_impl.1} parent=0 // loop_header
    %s8 = sphi 0, %s12
    %p9 = scmp.ge.s32.totalorder %s8, 4
    %s18 = sphi 0, %s20
    %s21 = sphi 0, %s18
    %s22 = sphi 0, %s21
    %s38 = sphi 0, %s22
    %s44 = sphi 0, %s46
    %s47 = sphi 0, %s44
    %s48 = sphi 0, %s47
    %s64 = sphi 0, %s48
    %s70 = sphi 0, %s72
    %s73 = sphi 0, %s70
    %s74 = sphi 0, %s73
    %s90 = sphi 0, %s74
  $region4: #{_content_loss_impl.1} parent=0 // loop_header_branch
    %11 = sbr.rel (%p9) target = $region8
  $region5: #{_content_loss_impl.1} parent=0 // loop_body
    %s13 = ssub.s32 %s8, 1
    %s14 = ssub.s32 %s8, 2
    %s15 = sadd.s32 %s8, 1
    %s16 = ssub.s32 %s8, %s15
    %p17 = scmp.eq.s32.totalorder %s16, 0
    %s19 = sadd.s32 %s18, 1
    %s20 = scalar_select %p17, %s18, %s19
    %p23 = pneg %p17
    %p24 = scmp.eq.s32.totalorder %s8, 1
    %p25 = por %p23, %p24
    %p26 = scmp.ne.s32.totalorder %s18, %s21
    %p27 = scmp.eq.s32.totalorder %s8, 0
    %p28 = por %p26, %p27
    %p29 = scmp.ne.s32.totalorder %s18, %s21
    %p30 = scmp.eq.s32.totalorder %s13, 1
    %p31 = por %p29, %p30
    %p32 = scmp.ne.s32.totalorder %s21, %s22
    %p33 = scmp.eq.s32.totalorder %s13, 0
    %p34 = por %p32, %p33
    %p35 = scmp.ne.s32.totalorder %s21, %s22
    %p36 = scmp.eq.s32.totalorder %s14, 1
    %p37 = por %p35, %p36
    %p39 = scmp.ne.s32.totalorder %s22, %s38
    %p40 = scmp.eq.s32.totalorder %s14, 0
    %p41 = por %p39, %p40
    %s42 = ssub.s32 %s8, %s15
    %p43 = scmp.eq.s32.totalorder %s42, 0
    %s45 = sadd.s32 %s44, 1
    %s46 = scalar_select %p43, %s44, %s45
    %p49 = pneg %p43
    %p50 = scmp.eq.s32.totalorder %s8, 1
    %p51 = por %p49, %p50
    %p52 = scmp.ne.s32.totalorder %s44, %s47
    %p53 = scmp.eq.s32.totalorder %s8, 0
    %p54 = por %p52, %p53
    %p55 = scmp.ne.s32.totalorder %s44, %s47
    %p56 = scmp.eq.s32.totalorder %s13, 1
    %p57 = por %p55, %p56
    %p58 = scmp.ne.s32.totalorder %s47, %s48
    %p59 = scmp.eq.s32.totalorder %s13, 0
    %p60 = por %p58, %p59
    %p61 = scmp.ne.s32.totalorder %s47, %s48
    %p62 = scmp.eq.s32.totalorder %s14, 1
    %p63 = por %p61, %p62
    %p65 = scmp.ne.s32.totalorder %s48, %s64
    %p66 = scmp.eq.s32.totalorder %s14, 0
    %p67 = por %p65, %p66
    %s68 = ssub.s32 %s8, %s15
    %p69 = scmp.eq.s32.totalorder %s68, 0
    %s71 = sadd.s32 %s70, 1
    %s72 = scalar_select %p69, %s70, %s71
    %p75 = pneg %p69
    %p76 = scmp.eq.s32.totalorder %s8, 1
    %p77 = por %p75, %p76
    %p78 = scmp.ne.s32.totalorder %s70, %s73
    %p79 = scmp.eq.s32.totalorder %s8, 0
    %p80 = por %p78, %p79
    %p81 = scmp.ne.s32.totalorder %s70, %s73
    %p82 = scmp.eq.s32.totalorder %s13, 1
    %p83 = por %p81, %p82
    %p84 = scmp.ne.s32.totalorder %s73, %s74
    %p85 = scmp.eq.s32.totalorder %s13, 0
    %p86 = por %p84, %p85
    %p87 = scmp.ne.s32.totalorder %s73, %s74
    %p88 = scmp.eq.s32.totalorder %s14, 1
    %p89 = por %p87, %p88
    %p91 = scmp.ne.s32.totalorder %s74, %s90
    %p92 = scmp.eq.s32.totalorder %s14, 0
    %p93 = por %p91, %p92
    %p94 = scmp.le.s32.totalorder 1, %s8
    %p95 = scmp.lt.s32.totalorder %s8, 3
    %p96 = pnand %p94, %p95
    %p97 = pneg %p96
    // Predicated region
    $region9: #{_content_loss_impl.1} parent=5 // pred_check
      _
    $region10: #{_content_loss_impl.1} parent=5 // pred_check_branch
      %99 = sbr.rel (%p96) target = $region12
    $region11: #{_content_loss_impl.1} parent=5 // pred_region
      %s100 = ssub.s32 %s8, 1
    $region12: #{_content_loss_impl.1} parent=5 // pred_fallthru
      _
    %p101 = scmp.lt.s32.totalorder %s8, 2
    // Predicated region
    $region13: #{_content_loss_impl.1} parent=5 // pred_check
      %p102 = pneg %p101
    $region14: #{_content_loss_impl.1} parent=5 // pred_check_branch
      %104 = sbr.rel (%p102) target = $region16
    $region15: #{_content_loss_impl.1} parent=5 // pred_region
      // Predicated region
      $region17: #{_content_loss_impl.1} parent=15 // pred_check
        %p105 = pneg %p28
      $region18: #{_content_loss_impl.1} parent=15 // pred_check_branch
        %107 = sbr.rel (%p105) target = $region20
      $region19: #{_content_loss_impl.1} parent=15 // pred_region
        %p108 = scmp.lt.s32.totalorder %s8, 1
        %s109 = scalar_select %p108, %s8, 1
        %s110 = smul.addr %s109, 8
        %s111 = scalar_lea.vmem %s0, %s110
      $region20: #{_content_loss_impl.1} parent=15 // pred_fallthru
        _
      // Predicated region
      $region21: #{_content_loss_impl.1} parent=15 // pred_check
        %p112 = pneg %p54
      $region22: #{_content_loss_impl.1} parent=15 // pred_check_branch
        %114 = sbr.rel (%p112) target = $region24
      $region23: #{_content_loss_impl.1} parent=15 // pred_region
        %p115 = scmp.lt.s32.totalorder %s8, 1
        %s116 = scalar_select %p115, %s8, 1
        %s117 = smul.addr %s116, 8
        %s118 = scalar_lea.vmem %s1, %s117
      $region24: #{_content_loss_impl.1} parent=15 // pred_fallthru
        _
    $region16: #{_content_loss_impl.1} parent=5 // pred_fallthru
      _
    %p119 = scmp.le.s32.totalorder 1, %s8
    %p120 = scmp.lt.s32.totalorder %s8, 3
    %p121 = pnand %p119, %p120
    %p122 = pneg %p121
    // Predicated region
    $region25: #{_content_loss_impl.1} parent=5 // pred_check
      _
    $region26: #{_content_loss_impl.1} parent=5 // pred_check_branch
      %124 = sbr.rel (%p121) target = $region28
    $region27: #{_content_loss_impl.1} parent=5 // pred_region
      %s125 = ssub.s32 %s8, 1
      %p126 = scmp.lt.s32.totalorder %s13, 1
      %s127 = scalar_select %p126, %s13, 1
      %s128 = smul.addr %s127, 8
      %s129 = scalar_lea.vmem %s0, %s128
      %p130 = pneg %p34
      %p131 = pneg %p31
      %p132 = scmp.lt.s32.totalorder %s13, 1
      %s133 = scalar_select %p132, %s13, 1
      %s134 = smul.addr %s133, 8
      %s135 = scalar_lea.vmem %s1, %s134
      %p136 = pneg %p60
      %p137 = pneg %p57
      %p138 = pneg %p86
      %p139 = pneg %p83
      %p140 = scmp.lt.s32.totalorder %s13, 1
      %s141 = scalar_select %p140, %s13, 1
      %s142 = smul.addr %s141, 8
      %s143 = scalar_lea.vmem %s2, %s142
      %p144 = scmp.lt.s32.totalorder %s13, 1
      %s145 = scalar_select %p144, %s13, 1
      %s146 = smul.addr %s145, 8
      %s147 = scalar_lea.vmem %s0, %s146
      %p148 = scmp.lt.s32.totalorder %s13, 1
      %s149 = scalar_select %p148, %s13, 1
      %s150 = smul.addr %s149, 8
      %s151 = scalar_lea.vmem %s1, %s150
      %p152 = scmp.lt.s32.totalorder %s13, 1
      %s153 = scalar_select %p152, %s13, 1
      %s154 = smul.addr %s153, 8
      %s155 = scalar_lea.vmem %s2, %s154
      %v156 = vld [vmem:[%s147] sm:$0xff]
      %v157 = vld [vmem:[%s151] sm:$0xff]
      %v158 = vsub.f32 %v156, %v157
      %v159 = vmul.f32 %v158, %v158
      %v160 = vadd.f32 %v159, 0.0
      %161 = vst [vmem:[%s155] sm:$0xff] %v160
      %p162 = scmp.lt.s32.totalorder %s13, 1
      %s163 = scalar_select %p162, %s13, 1
      %s164 = smul.addr %s163, 8
      %s165 = scalar_lea.vmem %s2, %s164
      // Predicated region
      $region29: #{_content_loss_impl.1} parent=27 // pred_check
        %p166 = pneg %p83
      $region30: #{_content_loss_impl.1} parent=27 // pred_check_branch
        %168 = sbr.rel (%p166) target = $region32
      $region31: #{_content_loss_impl.1} parent=27 // pred_region
        _
      $region32: #{_content_loss_impl.1} parent=27 // pred_fallthru
        _
    $region28: #{_content_loss_impl.1} parent=5 // pred_fallthru
      _
    %p169 = scmp.le.s32.totalorder 2, %s8
    // Predicated region
    $region33: #{_content_loss_impl.1} parent=5 // pred_check
      %p170 = pneg %p169
    $region34: #{_content_loss_impl.1} parent=5 // pred_check_branch
      %172 = sbr.rel (%p170) target = $region36
    $region35: #{_content_loss_impl.1} parent=5 // pred_region
      %s173 = ssub.s32 %s8, 2
      // Predicated region
      $region37: #{_content_loss_impl.1} parent=35 // pred_check
        %p174 = pneg %p89
      $region38: #{_content_loss_impl.1} parent=35 // pred_check_branch
        %176 = sbr.rel (%p174) target = $region40
      $region39: #{_content_loss_impl.1} parent=35 // pred_region
        %p177 = scmp.lt.s32.totalorder %s14, 1
        %s178 = scalar_select %p177, %s14, 1
        %s179 = smul.addr %s178, 8
        %s180 = scalar_lea.vmem %s2, %s179
      $region40: #{_content_loss_impl.1} parent=35 // pred_fallthru
        _
    $region36: #{_content_loss_impl.1} parent=5 // pred_fallthru
      _
  $region6: #{_content_loss_impl.1} parent=0 // loop_footer
    %s12 = sadd.s32 1, %s8
  $region7: #{_content_loss_impl.1} parent=0 // loop_footer_branch
    %7 = sbr.rel target = $region3
  $region8: #{_content_loss_impl.1} parent=0 // loop_exit
    _

</llo_original>
